<compile_context>
chip_gen: v7x
topology: tpu7x:2x2x1
jax: 0.10.0
libtpu: 0.0.40
codegen_flags: <defaults>
</compile_context>

<pallas_src>
import functools
import math

import jax
import jax.numpy as jnp
from jax import lax
from jax.experimental import pallas as pl
from jax.experimental.pallas import tpu as pltpu


_LANES = 128
_TARGET_ROWS = 8192                       # rows per grid step
_BLOCK_BYTE_BUDGET = 8 * 1024 * 1024      # per input block (x2 for double buffer)
_MAX_PACKED_COLS = 1024                   # cap on k*W for the packed/MXU path


def _cdiv(a: int, b: int) -> int:
    return -(-a // b)


def _vmem_limit_bytes() -> int:
    """Generation-aware scoped-VMEM limit (~half of physical VMEM)."""
    cap = 64 * 1024 * 1024
    try:
        cap = int(getattr(pltpu.get_tpu_info(), "vmem_capacity_bytes", cap))
    except Exception:
        pass
    # v5e/v6e (128 MiB physical) -> 64 MiB scoped; v7x (64 MiB) -> 32 MiB.
    return max(32 * 1024 * 1024, min(64 * 1024 * 1024, cap // 2))


def _sublane_pack(itemsize: int) -> int:
    # Native sublane packing: 8 (4-byte), 16 (2-byte), 32 (1-byte) dtypes.
    return max(8, 32 // max(itemsize, 1))


def _pick_tile(rows: int, row_bytes: int, sub: int) -> int:
    """Rows per grid step: multi-MiB blocks, dtype-aware rounding, and keep the
    grid at >= 2 steps when legal so both v7x TensorCores get work."""
    t = min(_TARGET_ROWS, max(1, _BLOCK_BYTE_BUDGET // max(row_bytes, 1)))
    if t >= rows:
        # Whole array fits in one block -> split in two for megacore if legal.
        if rows >= 2 * sub:
            half = ((rows + 1) // 2 + sub - 1) // sub * sub
            if half < rows:
                return half
        return rows                       # single full block (== array extent)
    if t >= _LANES:
        return (t // _LANES) * _LANES     # also keeps lane-dense stores unmasked
    return max(sub, (t // sub) * sub)


def _packed_mean_kernel(x_ref, s_ref, o_ref, *, inv_w, precision):
    # x_ref: [tile_r, k*W]   s_ref: [k*W, k] (0/1 block-diag)   o_ref: [tile_r, k]
    acc = jnp.dot(x_ref[...], s_ref[...], precision=precision,
                  preferred_element_type=jnp.float32)
    o_ref[...] = (acc * inv_w).astype(o_ref.dtype)


def _rowmean_kernel(x_ref, o_ref, acc_ref, *, inv_w, w_total, needs_mask):
    # x_ref: [tile_r, tile_w]   o_ref: [1, 1, tile_r]   acc_ref: [tile_r, 1] f32
    j = pl.program_id(1)

    @pl.when(j == 0)
    def _():
        acc_ref[...] = jnp.zeros_like(acc_ref)

    x = x_ref[...]
    if needs_mask:                        # partial last W tile -> zero the tail
        col = lax.broadcasted_iota(jnp.int32, x.shape, dimension=1)
        x = jnp.where(col < (w_total - j * x.shape[-1]), x, jnp.zeros_like(x))
    acc_ref[...] += jnp.sum(x, axis=-1, keepdims=True, dtype=jnp.float32)

    @pl.when(j == pl.num_programs(1) - 1)
    def _():
        # Lane-dense store: (tile_r, 1) column -> (1, 1, tile_r) row.
        v = (acc_ref[...] * inv_w).astype(o_ref.dtype)
        o_ref[...] = v.reshape(1, 1, -1)


def avg_pool_last_dim(x):
    """Pallas TPU equivalent of torch.mean(x, dim=-1, keepdim=True)."""
    orig_shape = x.shape
    lead = tuple(int(d) for d in orig_shape[:-1])
    W = int(orig_shape[-1])
    R = int(math.prod(lead)) if lead else 1
    out_shape_final = lead + (1,)

    is_float = jnp.issubdtype(x.dtype, jnp.floating)
    out_dtype = x.dtype if is_float else jnp.float32   # torch.mean is float-only

    if R == 0:
        return jnp.zeros(out_shape_final, dtype=out_dtype)
    if W == 1:                                         # mean over a length-1 axis
        return x.reshape(out_shape_final).astype(out_dtype)

    itemsize = jnp.dtype(x.dtype).itemsize
    sub = _sublane_pack(itemsize)
    inv_w = 1.0 / W
    vmem_limit = _vmem_limit_bytes()
    x2 = x.reshape(R, W)

    # ---------------- packed / MXU path (float dtypes, pack-friendly W) -------
    k = _LANES // math.gcd(W, _LANES)
    if is_float and k > 1 and k * W <= _MAX_PACKED_COLS:
        R_pad = _cdiv(R, k) * k
        if R_pad != R:
            # TODO(synk): handle the tail rows with a second tiny call instead of
            # this full-array pad copy (rare: leading-dims product not % k).
            x2 = jnp.pad(x2, ((0, R_pad - R), (0, 0)))
        R2 = R_pad // k
        xp = x2.reshape(R2, k * W)                     # contiguous -> free reshape
        # 0/1 block-diagonal segment matrix (exact in any float dtype); the 1/W
        # scale is applied in f32 after the matmul.
        S = jnp.repeat(jnp.eye(k, dtype=x.dtype), W, axis=0)
        precision = (lax.Precision.HIGHEST if x.dtype == jnp.float32
                     else lax.Precision.DEFAULT)
        # TODO(synk): on v7x, verify the multi-pass f32 MXU matmul stays hidden
        # under the 3.2 TB/s DMA; if the vex slot binds, use a VPU reduce there.

        tile_r = _pick_tile(R2, k * W * itemsize, sub)
        grid = (_cdiv(R2, tile_r),)
        cost = pl.CostEstimate(
            flops=2 * R2 * (k * W) * k, transcendentals=0,
            bytes_accessed=R_pad * W * itemsize + R_pad * itemsize)

        out = pl.pallas_call(
            functools.partial(_packed_mean_kernel, inv_w=inv_w,
                              precision=precision),
            out_shape=jax.ShapeDtypeStruct((R2, k), out_dtype),
            grid=grid,
            in_specs=[
                pl.BlockSpec((tile_r, k * W), lambda i: (i, 0)),
                # Constant block index -> fetched once, stays resident.
                pl.BlockSpec((k * W, k), lambda i: (0, 0)),
            ],
            out_specs=pl.BlockSpec((tile_r, k), lambda i: (i, 0)),
            compiler_params=pltpu.CompilerParams(
                dimension_semantics=("parallel",),
                vmem_limit_bytes=vmem_limit),
            cost_estimate=cost,
        )(xp, S)
        # TODO(synk): emit the packed output lane-dense too if v7x bundles show
        # the store slot as a second bottleneck (lower priority than above).
        return out.reshape(R_pad)[:R].reshape(out_shape_final)

    # ---------------- general path (awkward / very wide W, non-float) --------
    lane_w = _cdiv(W, _LANES) * _LANES                 # VMEM-padded row width
    rows_at_full_w = _BLOCK_BYTE_BUDGET // max(lane_w * itemsize, 1)
    if rows_at_full_w >= min(R, _LANES):
        tile_w = W                                     # single block along W
        tile_r = _pick_tile(R, lane_w * itemsize, sub)
    else:
        # Very wide rows: split W onto a second ("arbitrary") grid axis with an
        # f32 accumulator; keep a lane-sized row tile.
        tile_r = R if R <= _LANES else _LANES
        tile_w = max(_LANES,
                     (_BLOCK_BYTE_BUDGET // (tile_r * itemsize)) // _LANES * _LANES)
    n_r = _cdiv(R, tile_r)
    n_w = _cdiv(W, tile_w)
    needs_mask = (W % tile_w) != 0

    cost = pl.CostEstimate(
        flops=2 * R * W, transcendentals=0,
        bytes_accessed=R * W * itemsize
        + n_r * tile_r * jnp.dtype(out_dtype).itemsize)

    out3 = pl.pallas_call(
        functools.partial(_rowmean_kernel, inv_w=inv_w, w_total=W,
                          needs_mask=needs_mask),
        out_shape=jax.ShapeDtypeStruct((n_r, 1, tile_r), out_dtype),
        grid=(n_r, n_w),
        in_specs=[pl.BlockSpec((tile_r, tile_w), lambda i, j: (i, j))],
        out_specs=pl.BlockSpec((1, 1, tile_r), lambda i, j: (i, 0, 0)),
        scratch_shapes=[pltpu.VMEM((tile_r, 1), jnp.float32)],
        compiler_params=pltpu.CompilerParams(
            dimension_semantics=("parallel", "arbitrary"),
            vmem_limit_bytes=vmem_limit),
        cost_estimate=cost,
    )(x2)
    return out3.reshape(n_r * tile_r)[:R].reshape(out_shape_final)


if __name__ == "__main__":
    keys = jax.random.split(jax.random.PRNGKey(0), 5)

    def _check(x, atol=1e-5, rtol=1e-5):
        y = jax.block_until_ready(avg_pool_last_dim(x))
        y_ref = jnp.mean(x, axis=-1, keepdims=True)
        assert y.shape == y_ref.shape, (y.shape, y_ref.shape)
        assert jnp.allclose(y, y_ref, atol=atol, rtol=rtol), float(
            jnp.max(jnp.abs(y - y_ref)))

    # 1) NCHW-style input -> packed MXU path (W=16, k=8), 2-step grid.
    _check(jax.random.normal(keys[0], (2, 4, 16, 16), dtype=jnp.float32))
    # 2) W=160 -> packed path with k=4 (k*W=640 lane-aligned).
    _check(jax.random.normal(keys[1], (2, 4, 160), dtype=jnp.float32))
    # 3) Packed path with R % k != 0 (pad fallback).
    _check(jax.random.normal(keys[2], (3, 16), dtype=jnp.float32))
    # 4) General path (W=300 can't pack), odd row count + partial row tile.
    _check(jax.random.normal(keys[3], (65, 9, 300), dtype=jnp.float32))
    # 5) General path with W split onto a second grid axis (+ tail masking).
    _check(jax.random.normal(keys[4], (2, 64, 33000), dtype=jnp.float32))

    print("KERNEL_OK")
</pallas_src>

<mosaic_0001>
module attributes {stable_mosaic.version = 11 : i64} {
  func.func @_packed_mean_kernel(%arg0: i32, %arg1: memref<8x128xf32, #tpu.memory_space<vmem>>, %arg2: memref<128x8xf32, #tpu.memory_space<vmem>>, %arg3: memref<8x8xf32, #tpu.memory_space<vmem>>) attributes {dimension_semantics = [#tpu.dimension_semantics<parallel>], iteration_bounds = array<i64: 2>, scalar_prefetch = 0 : i64, scratch_operands = 0 : i64, tpu.core_type = #tpu.core_type<tc>, window_params = [{transform_indices = @transform_0, window_bounds = array<i64: 8, 128>}, {pipeline_mode = #tpu.pipeline_mode<synchronous>, transform_indices = @transform_1, window_bounds = array<i64: 128, 8>}, {transform_indices = @transform_2, window_bounds = array<i64: 8, 8>}]} {
    %c0 = arith.constant 0 : index
    %c0_0 = arith.constant 0 : index
    %0 = vector.load %arg1[%c0, %c0_0] : memref<8x128xf32, #tpu.memory_space<vmem>>, vector<8x128xf32>
    %c0_1 = arith.constant 0 : index
    %c0_2 = arith.constant 0 : index
    %1 = vector.load %arg2[%c0_1, %c0_2] : memref<128x8xf32, #tpu.memory_space<vmem>>, vector<128x8xf32>
    %cst = arith.constant dense<0.000000e+00> : vector<8x8xf32>
    %2 = tpu.matmul %0, %1, %cst {dimension_numbers = #tpu.dot_dimension_numbers<[1], [0], [0], [1], [0, 0, 1, 1], [], []>, precision = #tpu.contract_precision<fp32>} : vector<8x128xf32>, vector<128x8xf32>, vector<8x8xf32> -> vector<8x8xf32>
    %cst_3 = arith.constant 6.250000e-02 : f32
    %3 = vector.broadcast %cst_3 : f32 to vector<8x8xf32>
    %4 = arith.mulf %2, %3 : vector<8x8xf32>
    %c0_4 = arith.constant 0 : index
    %c0_5 = arith.constant 0 : index
    %5 = vector.load %arg3[%c0_4, %c0_5] : memref<8x8xf32, #tpu.memory_space<vmem>>, vector<8x8xf32>
    tpu.vector_store %arg3[%c0_4, %c0_5], %4 {strides = array<i32>} : memref<8x8xf32, #tpu.memory_space<vmem>>, vector<8x8xf32>,
    return
  }
  func.func @transform_0(%arg0: i32) -> (i32, i32) {
    %c0_i32 = arith.constant 0 : i32
    %c0_i32_0 = arith.constant 0 : i32
    return %arg0, %c0_i32 : i32, i32
  }
  func.func @transform_1(%arg0: i32) -> (i32, i32) {
    %c0_i32 = arith.constant 0 : i32
    %c0_i32_0 = arith.constant 0 : i32
    %c0_i32_1 = arith.constant 0 : i32
    return %c0_i32, %c0_i32_0 : i32, i32
  }
  func.func @transform_2(%arg0: i32) -> (i32, i32) {
    %c0_i32 = arith.constant 0 : i32
    %c0_i32_0 = arith.constant 0 : i32
    return %arg0, %c0_i32 : i32, i32
  }
}

</mosaic_0001>

<llo_original>
// kernel: tpu_custom_call.1
$region0: #{tpu_custom_call.1}
  #allocation0 [shape = 'u32[]', space=smem, size = 0x4, offset = 0x4, fixed_abs, tag = 'smem constant byte address 0x4 - core index']
  #allocation1 [shape = 'u32[144,128]{1,0:T(1,128)}', space=vmem, size = 0x12000, scoped, tag = 'internal scratch']
  %s0 = inlined_call_operand.vmem [shape: f32[16,128], index: 0, kind: input, shape index: {}]
  %s1 = inlined_call_operand.vmem [shape: f32[128,8], index: 1, kind: input, shape index: {}]
  %s2 = inlined_call_operand.vmem [shape: f32[16,8], index: 2, kind: output, shape index: {}]
  %s3 = sld [smem:[#allocation0]]
  $region41: #{tpu_custom_call.1} parent=0
    _
  %s5 = ssub.s32 1, %s3
  %s6 = scalar_select 0, %s5, %s3
  loop: start=0, step=1, limit=4
  $region2: #{tpu_custom_call.1} parent=0 // loop_pre_header
    _
  $region3: #{tpu_custom_call.1} parent=0 // loop_header
    %s8 = sphi 0, %s12
    %p9 = scmp.ge.s32.totalorder %s8, 4
    %s18 = sphi 0, %s20
    %s21 = sphi 0, %s18
    %s22 = sphi 0, %s21
    %s38 = sphi 0, %s22
    %s42 = sphi 0, %s42
    %s44 = sphi 0, %s42
    %s45 = sphi 0, %s44
    %s59 = sphi 0, %s45
    %s65 = sphi 0, %s67
    %s68 = sphi 0, %s65
    %s69 = sphi 0, %s68
    %s85 = sphi 0, %s69
  $region4: #{tpu_custom_call.1} parent=0 // loop_header_branch
    %11 = sbr.rel (%p9) target = $region8
  $region5: #{tpu_custom_call.1} parent=0 // loop_body
    %s13 = ssub.s32 %s8, 1
    %s14 = ssub.s32 %s8, 2
    %s15 = sadd.s32 %s8, 1
    %s16 = ssub.s32 %s8, %s15
    %p17 = scmp.eq.s32.totalorder %s16, 0
    %s19 = sadd.s32 %s18, 1
    %s20 = scalar_select %p17, %s18, %s19
    %p23 = pneg %p17
    %p24 = scmp.eq.s32.totalorder %s8, 1
    %p25 = por %p23, %p24
    %p26 = scmp.ne.s32.totalorder %s18, %s21
    %p27 = scmp.eq.s32.totalorder %s8, 0
    %p28 = por %p26, %p27
    %p29 = scmp.ne.s32.totalorder %s18, %s21
    %p30 = scmp.eq.s32.totalorder %s13, 1
    %p31 = por %p29, %p30
    %p32 = scmp.ne.s32.totalorder %s21, %s22
    %p33 = scmp.eq.s32.totalorder %s13, 0
    %p34 = por %p32, %p33
    %p35 = scmp.ne.s32.totalorder %s21, %s22
    %p36 = scmp.eq.s32.totalorder %s14, 1
    %p37 = por %p35, %p36
    %p39 = scmp.ne.s32.totalorder %s22, %s38
    %p40 = scmp.eq.s32.totalorder %s14, 0
    %p41 = por %p39, %p40
    %s43 = sadd.s32 %s42, 1
    %p46 = scmp.eq.s32.totalorder %s8, 1
    %p47 = scmp.ne.s32.totalorder %s42, %s44
    %p48 = scmp.eq.s32.totalorder %s8, 0
    %p49 = por %p47, %p48
    %p50 = scmp.ne.s32.totalorder %s42, %s44
    %p51 = scmp.eq.s32.totalorder %s13, 1
    %p52 = por %p50, %p51
    %p53 = scmp.ne.s32.totalorder %s44, %s45
    %p54 = scmp.eq.s32.totalorder %s13, 0
    %p55 = por %p53, %p54
    %p56 = scmp.ne.s32.totalorder %s44, %s45
    %p57 = scmp.eq.s32.totalorder %s14, 1
    %p58 = por %p56, %p57
    %p60 = scmp.ne.s32.totalorder %s45, %s59
    %p61 = scmp.eq.s32.totalorder %s14, 0
    %p62 = por %p60, %p61
    %s63 = ssub.s32 %s8, %s15
    %p64 = scmp.eq.s32.totalorder %s63, 0
    %s66 = sadd.s32 %s65, 1
    %s67 = scalar_select %p64, %s65, %s66
    %p70 = pneg %p64
    %p71 = scmp.eq.s32.totalorder %s8, 1
    %p72 = por %p70, %p71
    %p73 = scmp.ne.s32.totalorder %s65, %s68
    %p74 = scmp.eq.s32.totalorder %s8, 0
    %p75 = por %p73, %p74
    %p76 = scmp.ne.s32.totalorder %s65, %s68
    %p77 = scmp.eq.s32.totalorder %s13, 1
    %p78 = por %p76, %p77
    %p79 = scmp.ne.s32.totalorder %s68, %s69
    %p80 = scmp.eq.s32.totalorder %s13, 0
    %p81 = por %p79, %p80
    %p82 = scmp.ne.s32.totalorder %s68, %s69
    %p83 = scmp.eq.s32.totalorder %s14, 1
    %p84 = por %p82, %p83
    %p86 = scmp.ne.s32.totalorder %s69, %s85
    %p87 = scmp.eq.s32.totalorder %s14, 0
    %p88 = por %p86, %p87
    %p89 = scmp.le.s32.totalorder 1, %s8
    %p90 = scmp.lt.s32.totalorder %s8, 3
    %p91 = pnand %p89, %p90
    %p92 = pneg %p91
    // Predicated region
    $region9: #{tpu_custom_call.1} parent=5 // pred_check
      _
    $region10: #{tpu_custom_call.1} parent=5 // pred_check_branch
      %94 = sbr.rel (%p91) target = $region12
    $region11: #{tpu_custom_call.1} parent=5 // pred_region
      %s95 = ssub.s32 %s8, 1
      // Predicated region
      $region13: #{tpu_custom_call.1} parent=11 // pred_check
        %p96 = pneg %p55
      $region14: #{tpu_custom_call.1} parent=11 // pred_check_branch
        %98 = sbr.rel (%p96) target = $region16
      $region15: #{tpu_custom_call.1} parent=11 // pred_region
        _
      $region16: #{tpu_custom_call.1} parent=11 // pred_fallthru
        _
    $region12: #{tpu_custom_call.1} parent=5 // pred_fallthru
      _
    %p99 = scmp.lt.s32.totalorder %s8, 2
    // Predicated region
    $region17: #{tpu_custom_call.1} parent=5 // pred_check
      %p100 = pneg %p99
    $region18: #{tpu_custom_call.1} parent=5 // pred_check_branch
      %102 = sbr.rel (%p100) target = $region20
    $region19: #{tpu_custom_call.1} parent=5 // pred_region
      // Predicated region
      $region21: #{tpu_custom_call.1} parent=19 // pred_check
        %p103 = pneg %p28
      $region22: #{tpu_custom_call.1} parent=19 // pred_check_branch
        %105 = sbr.rel (%p103) target = $region24
      $region23: #{tpu_custom_call.1} parent=19 // pred_region
        %p106 = scmp.lt.s32.totalorder %s8, 1
        %s107 = scalar_select %p106, %s8, 1
        %s108 = smul.addr %s107, 8
        %s109 = scalar_lea.vmem %s0, %s108
      $region24: #{tpu_custom_call.1} parent=19 // pred_fallthru
        _
    $region20: #{tpu_custom_call.1} parent=5 // pred_fallthru
      _
    %p110 = scmp.le.s32.totalorder 1, %s8
    %p111 = scmp.lt.s32.totalorder %s8, 3
    %p112 = pnand %p110, %p111
    %p113 = pneg %p112
    // Predicated region
    $region25: #{tpu_custom_call.1} parent=5 // pred_check
      _
    $region26: #{tpu_custom_call.1} parent=5 // pred_check_branch
      %115 = sbr.rel (%p112) target = $region28
    $region27: #{tpu_custom_call.1} parent=5 // pred_region
      %s116 = ssub.s32 %s8, 1
      %p117 = scmp.lt.s32.totalorder %s13, 1
      %s118 = scalar_select %p117, %s13, 1
      %s119 = smul.addr %s118, 8
      %s120 = scalar_lea.vmem %s0, %s119
      %p121 = pneg %p34
      %p122 = pneg %p31
      %p123 = pneg %p55
      %p124 = pneg %p52
      %p125 = pneg %p81
      %p126 = pneg %p78
      %p127 = scmp.lt.s32.totalorder %s13, 1
      %s128 = scalar_select %p127, %s13, 1
      %s129 = smul.addr %s128, 8
      %s130 = scalar_lea.vmem %s2, %s129
      %p131 = scmp.lt.s32.totalorder %s13, 1
      %s132 = scalar_select %p131, %s13, 1
      %s133 = smul.addr %s132, 8
      %s134 = scalar_lea.vmem %s0, %s133
      %p135 = scmp.lt.s32.totalorder %s13, 1
      %s136 = scalar_select %p135, %s13, 1
      %s137 = smul.addr %s136, 8
      %s138 = scalar_lea.vmem %s2, %s137
      %v139 = vld [vmem:[%s134] sm:$0xff]
      %v140 = vld [vmem:[%s1] sm:$0xff]
      %v141 = vld [vmem:[%s1 + $0x8] sm:$0xff]
      %v142 = vld [vmem:[%s1 + $0x10] sm:$0xff]
      %v143 = vld [vmem:[%s1 + $0x18] sm:$0xff]
      %v144 = vld [vmem:[%s1 + $0x20] sm:$0xff]
      %v145 = vld [vmem:[%s1 + $0x28] sm:$0xff]
      %v146 = vld [vmem:[%s1 + $0x30] sm:$0xff]
      %v147 = vld [vmem:[%s1 + $0x38] sm:$0xff]
      %v148 = vld [vmem:[%s1 + $0x40] sm:$0xff]
      %v149 = vld [vmem:[%s1 + $0x48] sm:$0xff]
      %v150 = vld [vmem:[%s1 + $0x50] sm:$0xff]
      %v151 = vld [vmem:[%s1 + $0x58] sm:$0xff]
      %v152 = vld [vmem:[%s1 + $0x60] sm:$0xff]
      %v153 = vld [vmem:[%s1 + $0x68] sm:$0xff]
      %v154 = vld [vmem:[%s1 + $0x70] sm:$0xff]
      %v155 = vld [vmem:[%s1 + $0x78] sm:$0xff]
      %156 = vmatprep.subr.mxu0 0.0
      %v157 = vand.u32 %v140, 4294901760
      %158 = vmatpush1.msra.mxu0 %v157
      %159 = vmatprep.subr.mxu0 0.0
      %v160 = vand.u32 %v141, 4294901760
      %161 = vmatpush1.msra.mxu0 %v160
      %162 = vmatprep.subr.mxu0 0.0
      %v163 = vand.u32 %v142, 4294901760
      %164 = vmatpush1.msra.mxu0 %v163
      %165 = vmatprep.subr.mxu0 0.0
      %v166 = vand.u32 %v143, 4294901760
      %167 = vmatpush1.msra.mxu0 %v166
      %168 = vmatprep.subr.mxu0 0.0
      %v169 = vand.u32 %v144, 4294901760
      %170 = vmatpush1.msra.mxu0 %v169
      %171 = vmatprep.subr.mxu0 0.0
      %v172 = vand.u32 %v145, 4294901760
      %173 = vmatpush1.msra.mxu0 %v172
      %174 = vmatprep.subr.mxu0 0.0
      %v175 = vand.u32 %v146, 4294901760
      %176 = vmatpush1.msra.mxu0 %v175
      %177 = vmatprep.subr.mxu0 0.0
      %v178 = vand.u32 %v147, 4294901760
      %179 = vmatpush1.msra.mxu0 %v178
      %180 = vmatprep.subr.mxu0 0.0
      %v181 = vand.u32 %v148, 4294901760
      %182 = vmatpush1.msra.mxu0 %v181
      %183 = vmatprep.subr.mxu0 0.0
      %v184 = vand.u32 %v149, 4294901760
      %185 = vmatpush1.msra.mxu0 %v184
      %186 = vmatprep.subr.mxu0 0.0
      %v187 = vand.u32 %v150, 4294901760
      %188 = vmatpush1.msra.mxu0 %v187
      %189 = vmatprep.subr.mxu0 0.0
      %v190 = vand.u32 %v151, 4294901760
      %191 = vmatpush1.msra.mxu0 %v190
      %192 = vmatprep.subr.mxu0 0.0
      %v193 = vand.u32 %v152, 4294901760
      %194 = vmatpush1.msra.mxu0 %v193
      %195 = vmatprep.subr.mxu0 0.0
      %v196 = vand.u32 %v153, 4294901760
      %197 = vmatpush1.msra.mxu0 %v196
      %198 = vmatprep.subr.mxu0 0.0
      %v199 = vand.u32 %v154, 4294901760
      %200 = vmatpush1.msra.mxu0 %v199
      %201 = vmatprep.subr.mxu0 0.0
      %v202 = vand.u32 %v155, 4294901760
      %203 = vmatpush1.msra.mxu0 %v202
      %204 = vmatprep.subr.mxu0 0.0
      %205 = vmatpush1.msra.mxu0 0.0
      %206 = vmatprep.subr.mxu0 0.0
      %207 = vmatpush1.msra.mxu0 0.0
      %208 = vmatprep.subr.mxu0 0.0
      %209 = vmatpush1.msra.mxu0 0.0
      %210 = vmatprep.subr.mxu0 0.0
      %211 = vmatpush1.msra.mxu0 0.0
      %212 = vmatprep.subr.mxu0 0.0
      %213 = vmatpush1.msra.mxu0 0.0
      %214 = vmatprep.subr.mxu0 0.0
      %215 = vmatpush1.msra.mxu0 0.0
      %216 = vmatprep.subr.mxu0 0.0
      %217 = vmatpush1.msra.mxu0 0.0
      %218 = vmatprep.subr.mxu0 0.0
      %219 = vmatpush1.msra.mxu0 0.0
      %220 = vmatprep.subr.mxu0 0.0
      %221 = vmatpush1.msra.mxu0 0.0
      %222 = vmatprep.subr.mxu0 0.0
      %223 = vmatpush1.msra.mxu0 0.0
      %224 = vmatprep.subr.mxu0 0.0
      %225 = vmatpush1.msra.mxu0 0.0
      %226 = vmatprep.subr.mxu0 0.0
      %227 = vmatpush1.msra.mxu0 0.0
      %228 = vmatprep.subr.mxu0 0.0
      %229 = vmatpush1.msra.mxu0 0.0
      %230 = vmatprep.subr.mxu0 0.0
      %231 = vmatpush1.msra.mxu0 0.0
      %232 = vmatprep.subr.mxu0 0.0
      %233 = vmatpush1.msra.mxu0 0.0
      %234 = vmatprep.subr.mxu0 0.0
      %235 = vmatpush1.msra.mxu0 0.0
      %236 = vmatprep.mubr.f32.mxu0 0.0
      %v237 = vand.u32 %v139, 4294901760
      %v238 = vsub.f32 %v139, %v237
      %v239 = vand.u32 %v238, 4294901760
      %v240 = vsub.f32 %v238, %v239
      %v241 = vand.u32 %v240, 4294901760
      %242 = vmatmul.mubr.f32.gmra.mrb[0].mxu0 %v241
      %v243 = vpop.f32.mrb[0].mxu0
      %v244 = vadd.f32 0.0, %v243
      %v245 = vpop.f32.mrb[0].mxu0
      %246 = vdwg.mxu0
      %247 = vmatprep.subr.mxu0 0.0
      %v248 = vand.u32 %v140, 4294901760
      %v249 = vsub.f32 %v140, %v248
      %v250 = vand.u32 %v249, 4294901760
      %v251 = vsub.f32 %v249, %v250
      %v252 = vand.u32 %v251, 4294901760
      %253 = vmatpush1.msra.mxu0 %v252
      %254 = vmatprep.subr.mxu0 0.0
      %v255 = vand.u32 %v141, 4294901760
      %v256 = vsub.f32 %v141, %v255
      %v257 = vand.u32 %v256, 4294901760
      %v258 = vsub.f32 %v256, %v257
      %v259 = vand.u32 %v258, 4294901760
      %260 = vmatpush1.msra.mxu0 %v259
      %261 = vmatprep.subr.mxu0 0.0
      %v262 = vand.u32 %v142, 4294901760
      %v263 = vsub.f32 %v142, %v262
      %v264 = vand.u32 %v263, 4294901760
      %v265 = vsub.f32 %v263, %v264
      %v266 = vand.u32 %v265, 4294901760
      %267 = vmatpush1.msra.mxu0 %v266
      %268 = vmatprep.subr.mxu0 0.0
      %v269 = vand.u32 %v143, 4294901760
      %v270 = vsub.f32 %v143, %v269
      %v271 = vand.u32 %v270, 4294901760
      %v272 = vsub.f32 %v270, %v271
      %v273 = vand.u32 %v272, 4294901760
      %274 = vmatpush1.msra.mxu0 %v273
      %275 = vmatprep.subr.mxu0 0.0
      %v276 = vand.u32 %v144, 4294901760
      %v277 = vsub.f32 %v144, %v276
      %v278 = vand.u32 %v277, 4294901760
      %v279 = vsub.f32 %v277, %v278
      %v280 = vand.u32 %v279, 4294901760
      %281 = vmatpush1.msra.mxu0 %v280
      %282 = vmatprep.subr.mxu0 0.0
      %v283 = vand.u32 %v145, 4294901760
      %v284 = vsub.f32 %v145, %v283
      %v285 = vand.u32 %v284, 4294901760
      %v286 = vsub.f32 %v284, %v285
      %v287 = vand.u32 %v286, 4294901760
      %288 = vmatpush1.msra.mxu0 %v287
      %289 = vmatprep.subr.mxu0 0.0
      %v290 = vand.u32 %v146, 4294901760
      %v291 = vsub.f32 %v146, %v290
      %v292 = vand.u32 %v291, 4294901760
      %v293 = vsub.f32 %v291, %v292
      %v294 = vand.u32 %v293, 4294901760
      %295 = vmatpush1.msra.mxu0 %v294
      %296 = vmatprep.subr.mxu0 0.0
      %v297 = vand.u32 %v147, 4294901760
      %v298 = vsub.f32 %v147, %v297
      %v299 = vand.u32 %v298, 4294901760
      %v300 = vsub.f32 %v298, %v299
      %v301 = vand.u32 %v300, 4294901760
      %302 = vmatpush1.msra.mxu0 %v301
      %303 = vmatprep.subr.mxu0 0.0
      %v304 = vand.u32 %v148, 4294901760
      %v305 = vsub.f32 %v148, %v304
      %v306 = vand.u32 %v305, 4294901760
      %v307 = vsub.f32 %v305, %v306
      %v308 = vand.u32 %v307, 4294901760
      %309 = vmatpush1.msra.mxu0 %v308
      %310 = vmatprep.subr.mxu0 0.0
      %v311 = vand.u32 %v149, 4294901760
      %v312 = vsub.f32 %v149, %v311
      %v313 = vand.u32 %v312, 4294901760
      %v314 = vsub.f32 %v312, %v313
      %v315 = vand.u32 %v314, 4294901760
      %316 = vmatpush1.msra.mxu0 %v315
      %317 = vmatprep.subr.mxu0 0.0
      %v318 = vand.u32 %v150, 4294901760
      %v319 = vsub.f32 %v150, %v318
      %v320 = vand.u32 %v319, 4294901760
      %v321 = vsub.f32 %v319, %v320
      %v322 = vand.u32 %v321, 4294901760
      %323 = vmatpush1.msra.mxu0 %v322
      %324 = vmatprep.subr.mxu0 0.0
      %v325 = vand.u32 %v151, 4294901760
      %v326 = vsub.f32 %v151, %v325
      %v327 = vand.u32 %v326, 4294901760
      %v328 = vsub.f32 %v326, %v327
      %v329 = vand.u32 %v328, 4294901760
      %330 = vmatpush1.msra.mxu0 %v329
      %331 = vmatprep.subr.mxu0 0.0
      %v332 = vand.u32 %v152, 4294901760
      %v333 = vsub.f32 %v152, %v332
      %v334 = vand.u32 %v333, 4294901760
      %v335 = vsub.f32 %v333, %v334
      %v336 = vand.u32 %v335, 4294901760
      %337 = vmatpush1.msra.mxu0 %v336
      %338 = vmatprep.subr.mxu0 0.0
      %v339 = vand.u32 %v153, 4294901760
      %v340 = vsub.f32 %v153, %v339
      %v341 = vand.u32 %v340, 4294901760
      %v342 = vsub.f32 %v340, %v341
      %v343 = vand.u32 %v342, 4294901760
      %344 = vmatpush1.msra.mxu0 %v343
      %345 = vmatprep.subr.mxu0 0.0
      %v346 = vand.u32 %v154, 4294901760
      %v347 = vsub.f32 %v154, %v346
      %v348 = vand.u32 %v347, 4294901760
      %v349 = vsub.f32 %v347, %v348
      %v350 = vand.u32 %v349, 4294901760
      %351 = vmatpush1.msra.mxu0 %v350
      %352 = vmatprep.subr.mxu0 0.0
      %v353 = vand.u32 %v155, 4294901760
      %v354 = vsub.f32 %v155, %v353
      %v355 = vand.u32 %v354, 4294901760
      %v356 = vsub.f32 %v354, %v355
      %v357 = vand.u32 %v356, 4294901760
      %358 = vmatpush1.msra.mxu0 %v357
      %359 = vmatprep.subr.mxu0 0.0
      %360 = vmatpush1.msra.mxu0 0.0
      %361 = vmatprep.subr.mxu0 0.0
      %362 = vmatpush1.msra.mxu0 0.0
      %363 = vmatprep.subr.mxu0 0.0
      %364 = vmatpush1.msra.mxu0 0.0
      %365 = vmatprep.subr.mxu0 0.0
      %366 = vmatpush1.msra.mxu0 0.0
      %367 = vmatprep.subr.mxu0 0.0
      %368 = vmatpush1.msra.mxu0 0.0
      %369 = vmatprep.subr.mxu0 0.0
      %370 = vmatpush1.msra.mxu0 0.0
      %371 = vmatprep.subr.mxu0 0.0
      %372 = vmatpush1.msra.mxu0 0.0
      %373 = vmatprep.subr.mxu0 0.0
      %374 = vmatpush1.msra.mxu0 0.0
      %375 = vmatprep.subr.mxu0 0.0
      %376 = vmatpush1.msra.mxu0 0.0
      %377 = vmatprep.subr.mxu0 0.0
      %378 = vmatpush1.msra.mxu0 0.0
      %379 = vmatprep.subr.mxu0 0.0
      %380 = vmatpush1.msra.mxu0 0.0
      %381 = vmatprep.subr.mxu0 0.0
      %382 = vmatpush1.msra.mxu0 0.0
      %383 = vmatprep.subr.mxu0 0.0
      %384 = vmatpush1.msra.mxu0 0.0
      %385 = vmatprep.subr.mxu0 0.0
      %386 = vmatpush1.msra.mxu0 0.0
      %387 = vmatprep.subr.mxu0 0.0
      %388 = vmatpush1.msra.mxu0 0.0
      %389 = vmatprep.subr.mxu0 0.0
      %390 = vmatpush1.msra.mxu0 0.0
      %391 = vmatprep.mubr.f32.mxu0 0.0
      %v392 = vand.u32 %v139, 4294901760
      %393 = vmatmul.mubr.f32.gmra.mrb[0].mxu0 %v392
      %v394 = vpop.f32.mrb[0].mxu0
      %v395 = vadd.f32 %v244, %v394
      %v396 = vpop.f32.mrb[0].mxu0
      %397 = vdwg.mxu0
      %398 = vmatprep.subr.mxu0 0.0
      %v399 = vand.u32 %v140, 4294901760
      %v400 = vsub.f32 %v140, %v399
      %401 = vmatpush1.msra.mxu0 %v400
      %402 = vmatprep.subr.mxu0 0.0
      %v403 = vand.u32 %v141, 4294901760
      %v404 = vsub.f32 %v141, %v403
      %405 = vmatpush1.msra.mxu0 %v404
      %406 = vmatprep.subr.mxu0 0.0
      %v407 = vand.u32 %v142, 4294901760
      %v408 = vsub.f32 %v142, %v407
      %409 = vmatpush1.msra.mxu0 %v408
      %410 = vmatprep.subr.mxu0 0.0
      %v411 = vand.u32 %v143, 4294901760
      %v412 = vsub.f32 %v143, %v411
      %413 = vmatpush1.msra.mxu0 %v412
      %414 = vmatprep.subr.mxu0 0.0
      %v415 = vand.u32 %v144, 4294901760
      %v416 = vsub.f32 %v144, %v415
      %417 = vmatpush1.msra.mxu0 %v416
      %418 = vmatprep.subr.mxu0 0.0
      %v419 = vand.u32 %v145, 4294901760
      %v420 = vsub.f32 %v145, %v419
      %421 = vmatpush1.msra.mxu0 %v420
      %422 = vmatprep.subr.mxu0 0.0
      %v423 = vand.u32 %v146, 4294901760
      %v424 = vsub.f32 %v146, %v423
      %425 = vmatpush1.msra.mxu0 %v424
      %426 = vmatprep.subr.mxu0 0.0
      %v427 = vand.u32 %v147, 4294901760
      %v428 = vsub.f32 %v147, %v427
      %429 = vmatpush1.msra.mxu0 %v428
      %430 = vmatprep.subr.mxu0 0.0
      %v431 = vand.u32 %v148, 4294901760
      %v432 = vsub.f32 %v148, %v431
      %433 = vmatpush1.msra.mxu0 %v432
      %434 = vmatprep.subr.mxu0 0.0
      %v435 = vand.u32 %v149, 4294901760
      %v436 = vsub.f32 %v149, %v435
      %437 = vmatpush1.msra.mxu0 %v436
      %438 = vmatprep.subr.mxu0 0.0
      %v439 = vand.u32 %v150, 4294901760
      %v440 = vsub.f32 %v150, %v439
      %441 = vmatpush1.msra.mxu0 %v440
      %442 = vmatprep.subr.mxu0 0.0
      %v443 = vand.u32 %v151, 4294901760
      %v444 = vsub.f32 %v151, %v443
      %445 = vmatpush1.msra.mxu0 %v444
      %446 = vmatprep.subr.mxu0 0.0
      %v447 = vand.u32 %v152, 4294901760
      %v448 = vsub.f32 %v152, %v447
      %449 = vmatpush1.msra.mxu0 %v448
      %450 = vmatprep.subr.mxu0 0.0
      %v451 = vand.u32 %v153, 4294901760
      %v452 = vsub.f32 %v153, %v451
      %453 = vmatpush1.msra.mxu0 %v452
      %454 = vmatprep.subr.mxu0 0.0
      %v455 = vand.u32 %v154, 4294901760
      %v456 = vsub.f32 %v154, %v455
      %457 = vmatpush1.msra.mxu0 %v456
      %458 = vmatprep.subr.mxu0 0.0
      %v459 = vand.u32 %v155, 4294901760
      %v460 = vsub.f32 %v155, %v459
      %461 = vmatpush1.msra.mxu0 %v460
      %462 = vmatprep.subr.mxu0 0.0
      %463 = vmatpush1.msra.mxu0 0.0
      %464 = vmatprep.subr.mxu0 0.0
      %465 = vmatpush1.msra.mxu0 0.0
      %466 = vmatprep.subr.mxu0 0.0
      %467 = vmatpush1.msra.mxu0 0.0
      %468 = vmatprep.subr.mxu0 0.0
      %469 = vmatpush1.msra.mxu0 0.0
      %470 = vmatprep.subr.mxu0 0.0
      %471 = vmatpush1.msra.mxu0 0.0
      %472 = vmatprep.subr.mxu0 0.0
      %473 = vmatpush1.msra.mxu0 0.0
      %474 = vmatprep.subr.mxu0 0.0
      %475 = vmatpush1.msra.mxu0 0.0
      %476 = vmatprep.subr.mxu0 0.0
      %477 = vmatpush1.msra.mxu0 0.0
      %478 = vmatprep.subr.mxu0 0.0
      %479 = vmatpush1.msra.mxu0 0.0
      %480 = vmatprep.subr.mxu0 0.0
      %481 = vmatpush1.msra.mxu0 0.0
      %482 = vmatprep.subr.mxu0 0.0
      %483 = vmatpush1.msra.mxu0 0.0
      %484 = vmatprep.subr.mxu0 0.0
      %485 = vmatpush1.msra.mxu0 0.0
      %486 = vmatprep.subr.mxu0 0.0
      %487 = vmatpush1.msra.mxu0 0.0
      %488 = vmatprep.subr.mxu0 0.0
      %489 = vmatpush1.msra.mxu0 0.0
      %490 = vmatprep.subr.mxu0 0.0
      %491 = vmatpush1.msra.mxu0 0.0
      %492 = vmatprep.subr.mxu0 0.0
      %493 = vmatpush1.msra.mxu0 0.0
      %494 = vmatprep.mubr.f32.mxu0 0.0
      %v495 = vand.u32 %v139, 4294901760
      %v496 = vsub.f32 %v139, %v495
      %497 = vmatmul.mubr.f32.gmra.mrb[0].mxu0 %v496
      %v498 = vpop.f32.mrb[0].mxu0
      %v499 = vadd.f32 %v395, %v498
      %v500 = vpop.f32.mrb[0].mxu0
      %501 = vdwg.mxu0
      %502 = vmatprep.subr.mxu0 0.0
      %v503 = vand.u32 %v140, 4294901760
      %504 = vmatpush1.msra.mxu0 %v503
      %505 = vmatprep.subr.mxu0 0.0
      %v506 = vand.u32 %v141, 4294901760
      %507 = vmatpush1.msra.mxu0 %v506
      %508 = vmatprep.subr.mxu0 0.0
      %v509 = vand.u32 %v142, 4294901760
      %510 = vmatpush1.msra.mxu0 %v509
      %511 = vmatprep.subr.mxu0 0.0
      %v512 = vand.u32 %v143, 4294901760
      %513 = vmatpush1.msra.mxu0 %v512
      %514 = vmatprep.subr.mxu0 0.0
      %v515 = vand.u32 %v144, 4294901760
      %516 = vmatpush1.msra.mxu0 %v515
      %517 = vmatprep.subr.mxu0 0.0
      %v518 = vand.u32 %v145, 4294901760
      %519 = vmatpush1.msra.mxu0 %v518
      %520 = vmatprep.subr.mxu0 0.0
      %v521 = vand.u32 %v146, 4294901760
      %522 = vmatpush1.msra.mxu0 %v521
      %523 = vmatprep.subr.mxu0 0.0
      %v524 = vand.u32 %v147, 4294901760
      %525 = vmatpush1.msra.mxu0 %v524
      %526 = vmatprep.subr.mxu0 0.0
      %v527 = vand.u32 %v148, 4294901760
      %528 = vmatpush1.msra.mxu0 %v527
      %529 = vmatprep.subr.mxu0 0.0
      %v530 = vand.u32 %v149, 4294901760
      %531 = vmatpush1.msra.mxu0 %v530
      %532 = vmatprep.subr.mxu0 0.0
      %v533 = vand.u32 %v150, 4294901760
      %534 = vmatpush1.msra.mxu0 %v533
      %535 = vmatprep.subr.mxu0 0.0
      %v536 = vand.u32 %v151, 4294901760
      %537 = vmatpush1.msra.mxu0 %v536
      %538 = vmatprep.subr.mxu0 0.0
      %v539 = vand.u32 %v152, 4294901760
      %540 = vmatpush1.msra.mxu0 %v539
      %541 = vmatprep.subr.mxu0 0.0
      %v542 = vand.u32 %v153, 4294901760
      %543 = vmatpush1.msra.mxu0 %v542
      %544 = vmatprep.subr.mxu0 0.0
      %v545 = vand.u32 %v154, 4294901760
      %546 = vmatpush1.msra.mxu0 %v545
      %547 = vmatprep.subr.mxu0 0.0
      %v548 = vand.u32 %v155, 4294901760
      %549 = vmatpush1.msra.mxu0 %v548
      %550 = vmatprep.subr.mxu0 0.0
      %551 = vmatpush1.msra.mxu0 0.0
      %552 = vmatprep.subr.mxu0 0.0
      %553 = vmatpush1.msra.mxu0 0.0
      %554 = vmatprep.subr.mxu0 0.0
      %555 = vmatpush1.msra.mxu0 0.0
      %556 = vmatprep.subr.mxu0 0.0
      %557 = vmatpush1.msra.mxu0 0.0
      %558 = vmatprep.subr.mxu0 0.0
      %559 = vmatpush1.msra.mxu0 0.0
      %560 = vmatprep.subr.mxu0 0.0
      %561 = vmatpush1.msra.mxu0 0.0
      %562 = vmatprep.subr.mxu0 0.0
      %563 = vmatpush1.msra.mxu0 0.0
      %564 = vmatprep.subr.mxu0 0.0
      %565 = vmatpush1.msra.mxu0 0.0
      %566 = vmatprep.subr.mxu0 0.0
      %567 = vmatpush1.msra.mxu0 0.0
      %568 = vmatprep.subr.mxu0 0.0
      %569 = vmatpush1.msra.mxu0 0.0
      %570 = vmatprep.subr.mxu0 0.0
      %571 = vmatpush1.msra.mxu0 0.0
      %572 = vmatprep.subr.mxu0 0.0
      %573 = vmatpush1.msra.mxu0 0.0
      %574 = vmatprep.subr.mxu0 0.0
      %575 = vmatpush1.msra.mxu0 0.0
      %576 = vmatprep.subr.mxu0 0.0
      %577 = vmatpush1.msra.mxu0 0.0
      %578 = vmatprep.subr.mxu0 0.0
      %579 = vmatpush1.msra.mxu0 0.0
      %580 = vmatprep.subr.mxu0 0.0
      %581 = vmatpush1.msra.mxu0 0.0
      %582 = vmatprep.mubr.f32.mxu0 0.0
      %v583 = vand.u32 %v139, 4294901760
      %v584 = vsub.f32 %v139, %v583
      %v585 = vand.u32 %v584, 4294901760
      %586 = vmatmul.mubr.f32.gmra.mrb[0].mxu0 %v585
      %v587 = vpop.f32.mrb[0].mxu0
      %v588 = vadd.f32 %v499, %v587
      %v589 = vpop.f32.mrb[0].mxu0
      %590 = vdwg.mxu0
      %591 = vmatprep.subr.mxu0 0.0
      %v592 = vand.u32 %v140, 4294901760
      %v593 = vsub.f32 %v140, %v592
      %v594 = vand.u32 %v593, 4294901760
      %595 = vmatpush1.msra.mxu0 %v594
      %596 = vmatprep.subr.mxu0 0.0
      %v597 = vand.u32 %v141, 4294901760
      %v598 = vsub.f32 %v141, %v597
      %v599 = vand.u32 %v598, 4294901760
      %600 = vmatpush1.msra.mxu0 %v599
      %601 = vmatprep.subr.mxu0 0.0
      %v602 = vand.u32 %v142, 4294901760
      %v603 = vsub.f32 %v142, %v602
      %v604 = vand.u32 %v603, 4294901760
      %605 = vmatpush1.msra.mxu0 %v604
      %606 = vmatprep.subr.mxu0 0.0
      %v607 = vand.u32 %v143, 4294901760
      %v608 = vsub.f32 %v143, %v607
      %v609 = vand.u32 %v608, 4294901760
      %610 = vmatpush1.msra.mxu0 %v609
      %611 = vmatprep.subr.mxu0 0.0
      %v612 = vand.u32 %v144, 4294901760
      %v613 = vsub.f32 %v144, %v612
      %v614 = vand.u32 %v613, 4294901760
      %615 = vmatpush1.msra.mxu0 %v614
      %616 = vmatprep.subr.mxu0 0.0
      %v617 = vand.u32 %v145, 4294901760
      %v618 = vsub.f32 %v145, %v617
      %v619 = vand.u32 %v618, 4294901760
      %620 = vmatpush1.msra.mxu0 %v619
      %621 = vmatprep.subr.mxu0 0.0
      %v622 = vand.u32 %v146, 4294901760
      %v623 = vsub.f32 %v146, %v622
      %v624 = vand.u32 %v623, 4294901760
      %625 = vmatpush1.msra.mxu0 %v624
      %626 = vmatprep.subr.mxu0 0.0
      %v627 = vand.u32 %v147, 4294901760
      %v628 = vsub.f32 %v147, %v627
      %v629 = vand.u32 %v628, 4294901760
      %630 = vmatpush1.msra.mxu0 %v629
      %631 = vmatprep.subr.mxu0 0.0
      %v632 = vand.u32 %v148, 4294901760
      %v633 = vsub.f32 %v148, %v632
      %v634 = vand.u32 %v633, 4294901760
      %635 = vmatpush1.msra.mxu0 %v634
      %636 = vmatprep.subr.mxu0 0.0
      %v637 = vand.u32 %v149, 4294901760
      %v638 = vsub.f32 %v149, %v637
      %v639 = vand.u32 %v638, 4294901760
      %640 = vmatpush1.msra.mxu0 %v639
      %641 = vmatprep.subr.mxu0 0.0
      %v642 = vand.u32 %v150, 4294901760
      %v643 = vsub.f32 %v150, %v642
      %v644 = vand.u32 %v643, 4294901760
      %645 = vmatpush1.msra.mxu0 %v644
      %646 = vmatprep.subr.mxu0 0.0
      %v647 = vand.u32 %v151, 4294901760
      %v648 = vsub.f32 %v151, %v647
      %v649 = vand.u32 %v648, 4294901760
      %650 = vmatpush1.msra.mxu0 %v649
      %651 = vmatprep.subr.mxu0 0.0
      %v652 = vand.u32 %v152, 4294901760
      %v653 = vsub.f32 %v152, %v652
      %v654 = vand.u32 %v653, 4294901760
      %655 = vmatpush1.msra.mxu0 %v654
      %656 = vmatprep.subr.mxu0 0.0
      %v657 = vand.u32 %v153, 4294901760
      %v658 = vsub.f32 %v153, %v657
      %v659 = vand.u32 %v658, 4294901760
      %660 = vmatpush1.msra.mxu0 %v659
      %661 = vmatprep.subr.mxu0 0.0
      %v662 = vand.u32 %v154, 4294901760
      %v663 = vsub.f32 %v154, %v662
      %v664 = vand.u32 %v663, 4294901760
      %665 = vmatpush1.msra.mxu0 %v664
      %666 = vmatprep.subr.mxu0 0.0
      %v667 = vand.u32 %v155, 4294901760
      %v668 = vsub.f32 %v155, %v667
      %v669 = vand.u32 %v668, 4294901760
      %670 = vmatpush1.msra.mxu0 %v669
      %671 = vmatprep.subr.mxu0 0.0
      %672 = vmatpush1.msra.mxu0 0.0
      %673 = vmatprep.subr.mxu0 0.0
      %674 = vmatpush1.msra.mxu0 0.0
      %675 = vmatprep.subr.mxu0 0.0
      %676 = vmatpush1.msra.mxu0 0.0
      %677 = vmatprep.subr.mxu0 0.0
      %678 = vmatpush1.msra.mxu0 0.0
      %679 = vmatprep.subr.mxu0 0.0
      %680 = vmatpush1.msra.mxu0 0.0
      %681 = vmatprep.subr.mxu0 0.0
      %682 = vmatpush1.msra.mxu0 0.0
      %683 = vmatprep.subr.mxu0 0.0
      %684 = vmatpush1.msra.mxu0 0.0
      %685 = vmatprep.subr.mxu0 0.0
      %686 = vmatpush1.msra.mxu0 0.0
      %687 = vmatprep.subr.mxu0 0.0
      %688 = vmatpush1.msra.mxu0 0.0
      %689 = vmatprep.subr.mxu0 0.0
      %690 = vmatpush1.msra.mxu0 0.0
      %691 = vmatprep.subr.mxu0 0.0
      %692 = vmatpush1.msra.mxu0 0.0
      %693 = vmatprep.subr.mxu0 0.0
      %694 = vmatpush1.msra.mxu0 0.0
      %695 = vmatprep.subr.mxu0 0.0
      %696 = vmatpush1.msra.mxu0 0.0
      %697 = vmatprep.subr.mxu0 0.0
      %698 = vmatpush1.msra.mxu0 0.0
      %699 = vmatprep.subr.mxu0 0.0
      %700 = vmatpush1.msra.mxu0 0.0
      %701 = vmatprep.subr.mxu0 0.0
      %702 = vmatpush1.msra.mxu0 0.0
      %703 = vmatprep.mubr.f32.mxu0 0.0
      %v704 = vand.u32 %v139, 4294901760
      %705 = vmatmul.mubr.f32.gmra.mrb[0].mxu0 %v704
      %v706 = vpop.f32.mrb[0].mxu0
      %v707 = vadd.f32 %v588, %v706
      %v708 = vpop.f32.mrb[0].mxu0
      %709 = vdwg.mxu0
      %710 = vmatprep.subr.mxu0 0.0
      %v711 = vand.u32 %v140, 4294901760
      %712 = vmatpush1.msra.mxu0 %v711
      %713 = vmatprep.subr.mxu0 0.0
      %v714 = vand.u32 %v141, 4294901760
      %715 = vmatpush1.msra.mxu0 %v714
      %716 = vmatprep.subr.mxu0 0.0
      %v717 = vand.u32 %v142, 4294901760
      %718 = vmatpush1.msra.mxu0 %v717
      %719 = vmatprep.subr.mxu0 0.0
      %v720 = vand.u32 %v143, 4294901760
      %721 = vmatpush1.msra.mxu0 %v720
      %722 = vmatprep.subr.mxu0 0.0
      %v723 = vand.u32 %v144, 4294901760
      %724 = vmatpush1.msra.mxu0 %v723
      %725 = vmatprep.subr.mxu0 0.0
      %v726 = vand.u32 %v145, 4294901760
      %727 = vmatpush1.msra.mxu0 %v726
      %728 = vmatprep.subr.mxu0 0.0
      %v729 = vand.u32 %v146, 4294901760
      %730 = vmatpush1.msra.mxu0 %v729
      %731 = vmatprep.subr.mxu0 0.0
      %v732 = vand.u32 %v147, 4294901760
      %733 = vmatpush1.msra.mxu0 %v732
      %734 = vmatprep.subr.mxu0 0.0
      %v735 = vand.u32 %v148, 4294901760
      %736 = vmatpush1.msra.mxu0 %v735
      %737 = vmatprep.subr.mxu0 0.0
      %v738 = vand.u32 %v149, 4294901760
      %739 = vmatpush1.msra.mxu0 %v738
      %740 = vmatprep.subr.mxu0 0.0
      %v741 = vand.u32 %v150, 4294901760
      %742 = vmatpush1.msra.mxu0 %v741
      %743 = vmatprep.subr.mxu0 0.0
      %v744 = vand.u32 %v151, 4294901760
      %745 = vmatpush1.msra.mxu0 %v744
      %746 = vmatprep.subr.mxu0 0.0
      %v747 = vand.u32 %v152, 4294901760
      %748 = vmatpush1.msra.mxu0 %v747
      %749 = vmatprep.subr.mxu0 0.0
      %v750 = vand.u32 %v153, 4294901760
      %751 = vmatpush1.msra.mxu0 %v750
      %752 = vmatprep.subr.mxu0 0.0
      %v753 = vand.u32 %v154, 4294901760
      %754 = vmatpush1.msra.mxu0 %v753
      %755 = vmatprep.subr.mxu0 0.0
      %v756 = vand.u32 %v155, 4294901760
      %757 = vmatpush1.msra.mxu0 %v756
      %758 = vmatprep.subr.mxu0 0.0
      %759 = vmatpush1.msra.mxu0 0.0
      %760 = vmatprep.subr.mxu0 0.0
      %761 = vmatpush1.msra.mxu0 0.0
      %762 = vmatprep.subr.mxu0 0.0
      %763 = vmatpush1.msra.mxu0 0.0
      %764 = vmatprep.subr.mxu0 0.0
      %765 = vmatpush1.msra.mxu0 0.0
      %766 = vmatprep.subr.mxu0 0.0
      %767 = vmatpush1.msra.mxu0 0.0
      %768 = vmatprep.subr.mxu0 0.0
      %769 = vmatpush1.msra.mxu0 0.0
      %770 = vmatprep.subr.mxu0 0.0
      %771 = vmatpush1.msra.mxu0 0.0
      %772 = vmatprep.subr.mxu0 0.0
      %773 = vmatpush1.msra.mxu0 0.0
      %774 = vmatprep.subr.mxu0 0.0
      %775 = vmatpush1.msra.mxu0 0.0
      %776 = vmatprep.subr.mxu0 0.0
      %777 = vmatpush1.msra.mxu0 0.0
      %778 = vmatprep.subr.mxu0 0.0
      %779 = vmatpush1.msra.mxu0 0.0
      %780 = vmatprep.subr.mxu0 0.0
      %781 = vmatpush1.msra.mxu0 0.0
      %782 = vmatprep.subr.mxu0 0.0
      %783 = vmatpush1.msra.mxu0 0.0
      %784 = vmatprep.subr.mxu0 0.0
      %785 = vmatpush1.msra.mxu0 0.0
      %786 = vmatprep.subr.mxu0 0.0
      %787 = vmatpush1.msra.mxu0 0.0
      %788 = vmatprep.subr.mxu0 0.0
      %789 = vmatpush1.msra.mxu0 0.0
      %790 = vmatprep.mubr.f32.mxu0 0.0
      %v791 = vand.u32 %v139, 4294901760
      %792 = vmatmul.mubr.f32.gmra.mrb[0].mxu0 %v791
      %v793 = vpop.f32.mrb[0].mxu0
      %v794 = vadd.f32 %v707, %v793
      %v795 = vpop.f32.mrb[0].mxu0
      %796 = vdwg.mxu0
      %v797 = vmul.f32 %v794, 0.0625
      %vm798 = vcmask 64512
      %799 = vst.msk [vmem:[%s138] sm:$0xff] %vm798, %v797
      %p800 = scmp.lt.s32.totalorder %s13, 1
      %s801 = scalar_select %p800, %s13, 1
      %s802 = smul.addr %s801, 8
      %s803 = scalar_lea.vmem %s2, %s802
      // Predicated region
      $region29: #{tpu_custom_call.1} parent=27 // pred_check
        %p804 = pneg %p78
      $region30: #{tpu_custom_call.1} parent=27 // pred_check_branch
        %806 = sbr.rel (%p804) target = $region32
      $region31: #{tpu_custom_call.1} parent=27 // pred_region
        _
      $region32: #{tpu_custom_call.1} parent=27 // pred_fallthru
        _
    $region28: #{tpu_custom_call.1} parent=5 // pred_fallthru
      _
    %p807 = scmp.le.s32.totalorder 2, %s8
    // Predicated region
    $region33: #{tpu_custom_call.1} parent=5 // pred_check
      %p808 = pneg %p807
    $region34: #{tpu_custom_call.1} parent=5 // pred_check_branch
      %810 = sbr.rel (%p808) target = $region36
    $region35: #{tpu_custom_call.1} parent=5 // pred_region
      %s811 = ssub.s32 %s8, 2
      // Predicated region
      $region37: #{tpu_custom_call.1} parent=35 // pred_check
        %p812 = pneg %p84
      $region38: #{tpu_custom_call.1} parent=35 // pred_check_branch
        %814 = sbr.rel (%p812) target = $region40
      $region39: #{tpu_custom_call.1} parent=35 // pred_region
        %p815 = scmp.lt.s32.totalorder %s14, 1
        %s816 = scalar_select %p815, %s14, 1
        %s817 = smul.addr %s816, 8
        %s818 = scalar_lea.vmem %s2, %s817
      $region40: #{tpu_custom_call.1} parent=35 // pred_fallthru
        _
    $region36: #{tpu_custom_call.1} parent=5 // pred_fallthru
      _
  $region6: #{tpu_custom_call.1} parent=0 // loop_footer
    %s12 = sadd.s32 1, %s8
  $region7: #{tpu_custom_call.1} parent=0 // loop_footer_branch
    %7 = sbr.rel target = $region3
  $region8: #{tpu_custom_call.1} parent=0 // loop_exit
    _

</llo_original>
